<compile_context>
chip_gen: v7x
topology: tpu7x:2x2x1
jax: 0.10.0
libtpu: 0.0.40
codegen_flags: <defaults>
</compile_context>

<pallas_src>
import jax
import jax.numpy as jnp
from jax import lax
from jax.experimental import pallas as pl
from jax.experimental.pallas import tpu as pltpu

BN_EPS = 1e-5


def _make_kernel(N, Cin, Cout, H, W, K, pad):
    HW = H * W
    inv_count = 1.0 / float(N * HW)

    def kernel(x_ref, wdw_ref, mask_ref, wbd_ref, g_ref, b_ref, o_ref):
        # ---- ReLU (VPU) ------------------------------------------------------
        xr = jnp.maximum(x_ref[...], 0.0)                       # (N*Cin, HW)

        # ---- Depthwise KxK conv: K*K lane-rolled FMAs (XLU + VPU) ------------
        # "SAME" zero padding realized with precomputed float mask planes
        # (resident constant input) -> per tap: roll + 2 muls + add.
        acc = None
        for kh in range(K):
            for kw in range(K):
                dh = kh - pad
                dwo = kw - pad
                off = dh * W + dwo
                t = kh * K + kw
                shifted = xr if off == 0 else pltpu.roll(xr, (-off) % HW, 1)
                w_col = wdw_ref[:, t:t + 1]                     # (N*Cin, 1)
                if dh == 0 and dwo == 0:
                    term = shifted * w_col                      # interior tap: no mask
                else:
                    term = shifted * (w_col * mask_ref[t:t + 1, :])
                acc = term if acc is None else acc + term       # (N*Cin, HW)

        # ---- Pointwise 1x1 conv on the MXU ------------------------------------
        # wbd = kron(I_N, W_pw): block-diagonal, so one matmul handles all images
        # without mixing channels across images.
        y = jnp.dot(wbd_ref[...], acc,
                    preferred_element_type=jnp.float32)         # (N*Cout, HW)
        y3 = y.reshape(N, Cout, HW)                             # sublane-aligned split

        # ---- BatchNorm2d (training-mode batch statistics), single pass --------
        mean = jnp.sum(jnp.sum(y3, axis=2, keepdims=True),
                       axis=0, keepdims=True) * inv_count       # (1, Cout, 1)
        centered = y3 - mean
        var = jnp.sum(jnp.sum(centered * centered, axis=2, keepdims=True),
                      axis=0, keepdims=True) * inv_count        # (1, Cout, 1)
        scale = g_ref[...].reshape(1, Cout, 1) * lax.rsqrt(var + BN_EPS)
        o_ref[...] = centered * scale + b_ref[...].reshape(1, Cout, 1)

    return kernel


def separable_block(x_nchw, w_dw, w_pw, gamma, beta, padding=1):
    """x: (N,Cin,H,W); w_dw: (Cin,1,K,K); w_pw: (Cout,Cin,1,1); gamma/beta: (Cout,)."""
    N, Cin, H, W = x_nchw.shape
    Cout = w_pw.shape[0]
    K = w_dw.shape[-1]
    assert K == 2 * padding + 1, "kernel assumes stride 1 and 'SAME' padding=(K-1)/2"
    HW = H * W

    # Contiguous (free) reshape of the input; tiny constant prep below.
    x_flat = x_nchw.reshape(N * Cin, HW).astype(jnp.float32)
    wdw_tiled = jnp.tile(w_dw.reshape(Cin, K * K).astype(jnp.float32), (N, 1))
    wbd = jnp.kron(jnp.eye(N, dtype=jnp.float32),
                   w_pw.reshape(Cout, Cin).astype(jnp.float32))     # (N*Cout, N*Cin)
    g = gamma.reshape(Cout, 1).astype(jnp.float32)
    b = beta.reshape(Cout, 1).astype(jnp.float32)

    # Precompute the K*K "SAME"-padding masks as float planes (passed once,
    # resident in VMEM for the whole kernel).
    idx = jnp.arange(HW, dtype=jnp.int32)
    hpos = idx // W
    wpos = idx - hpos * W
    planes = []
    for kh in range(K):
        for kw in range(K):
            dh, dwo = kh - padding, kw - padding
            m = jnp.ones((HW,), dtype=bool)
            if dh > 0:
                m &= hpos < H - dh
            elif dh < 0:
                m &= hpos >= -dh
            if dwo > 0:
                m &= wpos < W - dwo
            elif dwo < 0:
                m &= wpos >= -dwo
            planes.append(m.astype(jnp.float32))
    masks = jnp.stack(planes, axis=0)                               # (K*K, HW)

    kernel = _make_kernel(N, Cin, Cout, H, W, K, padding)

    # Accurate single-pass cost estimate (advisory for XLA scheduling).
    flops = (N * Cin * HW                        # ReLU
             + 3 * N * Cin * HW * K * K          # depthwise taps (2 mul + add)
             + 2 * N * Cout * Cin * HW           # pointwise matmul
             + 6 * N * Cout * HW)                # BN stats + normalize
    bytes_accessed = 4 * (N * Cin * HW + N * Cout * HW
                          + N * Cin * K * K + (N * Cout) * (N * Cin)
                          + K * K * HW + 2 * Cout)

    out = pl.pallas_call(
        kernel,
        out_shape=jax.ShapeDtypeStruct((N, Cout, HW), jnp.float32),
        grid=(1,),   # single step: whole problem fits comfortably in VMEM
        in_specs=[
            pl.BlockSpec((N * Cin, HW), lambda i: (0, 0)),          # x (ReLU input)
            pl.BlockSpec((N * Cin, K * K), lambda i: (0, 0)),       # depthwise weights (tiled)
            pl.BlockSpec((K * K, HW), lambda i: (0, 0)),            # padding mask planes
            pl.BlockSpec((N * Cout, N * Cin), lambda i: (0, 0)),    # block-diag pointwise weight
            pl.BlockSpec((Cout, 1), lambda i: (0, 0)),              # gamma
            pl.BlockSpec((Cout, 1), lambda i: (0, 0)),              # beta
        ],
        out_specs=pl.BlockSpec((N, Cout, HW), lambda i: (0, 0, 0)),
        compiler_params=pltpu.CompilerParams(
            dimension_semantics=("arbitrary",),
            vmem_limit_bytes=32 * 1024 * 1024),
        cost_estimate=pl.CostEstimate(
            flops=flops, transcendentals=Cout, bytes_accessed=bytes_accessed),
    )(x_flat, wdw_tiled, masks, wbd, g, b)

    return out.reshape(N, Cout, H, W)


def reference(x_nchw, w_dw, w_pw, gamma, beta, padding=1):
    """Pure-JAX reference mirroring the PyTorch module (training-mode BN)."""
    r = jnp.maximum(x_nchw, 0.0)
    Cin = x_nchw.shape[1]
    dw = lax.conv_general_dilated(
        r, w_dw, window_strides=(1, 1), padding=[(padding, padding)] * 2,
        feature_group_count=Cin, dimension_numbers=("NCHW", "OIHW", "NCHW"))
    pw = lax.conv_general_dilated(
        dw, w_pw, window_strides=(1, 1), padding=[(0, 0)] * 2,
        dimension_numbers=("NCHW", "OIHW", "NCHW"))
    mean = jnp.mean(pw, axis=(0, 2, 3), keepdims=True)
    var = jnp.mean((pw - mean) ** 2, axis=(0, 2, 3), keepdims=True)
    return ((pw - mean) * lax.rsqrt(var + BN_EPS)
            * gamma.reshape(1, -1, 1, 1) + beta.reshape(1, -1, 1, 1))


if __name__ == "__main__":
    # SeparableBlock(in_channels=4, out_channals=8, SepKsize=3), padding=1, stride=1
    N, Cin, Cout, H, W, K = 2, 4, 8, 16, 16, 3

    key = jax.random.PRNGKey(0)
    kx, kdw, kpw = jax.random.split(key, 3)
    x = jax.random.normal(kx, (N, Cin, H, W), dtype=jnp.float32)
    # deterministic "kaiming-like" init for conv weights (both convs are bias-free)
    w_dw = jax.random.normal(kdw, (Cin, 1, K, K), dtype=jnp.float32) * (1.0 / (K * K)) ** 0.5
    w_pw = jax.random.normal(kpw, (Cout, Cin, 1, 1), dtype=jnp.float32) * (1.0 / Cin) ** 0.5
    gamma = jnp.ones((Cout,), jnp.float32)   # nn.BatchNorm2d default weight
    beta = jnp.zeros((Cout,), jnp.float32)   # nn.BatchNorm2d default bias

    out = separable_block(x, w_dw, w_pw, gamma, beta, padding=1)
    out = jax.block_until_ready(out)

    ref = reference(x, w_dw, w_pw, gamma, beta, padding=1)
    assert out.shape == (N, Cout, H, W), out.shape
    assert jnp.allclose(out, ref, atol=1e-4, rtol=1e-4), float(jnp.max(jnp.abs(out - ref)))

    print("KERNEL_OK")
</pallas_src>

<mosaic_0001>
module attributes {stable_mosaic.version = 11 : i64} {
  func.func @kernel(%arg0: i32, %arg1: memref<8x256xf32, #tpu.memory_space<vmem>>, %arg2: memref<8x9xf32, #tpu.memory_space<vmem>>, %arg3: memref<9x256xf32, #tpu.memory_space<vmem>>, %arg4: memref<16x8xf32, #tpu.memory_space<vmem>>, %arg5: memref<8x1xf32, #tpu.memory_space<vmem>>, %arg6: memref<8x1xf32, #tpu.memory_space<vmem>>, %arg7: memref<2x8x256xf32, #tpu.memory_space<vmem>>) attributes {dimension_semantics = [#tpu.dimension_semantics<arbitrary>], iteration_bounds = array<i64: 1>, scalar_prefetch = 0 : i64, scratch_operands = 0 : i64, tpu.core_type = #tpu.core_type<tc>, window_params = [{pipeline_mode = #tpu.pipeline_mode<synchronous>, transform_indices = @transform_0, window_bounds = array<i64: 8, 256>}, {pipeline_mode = #tpu.pipeline_mode<synchronous>, transform_indices = @transform_1, window_bounds = array<i64: 8, 9>}, {pipeline_mode = #tpu.pipeline_mode<synchronous>, transform_indices = @transform_2, window_bounds = array<i64: 9, 256>}, {pipeline_mode = #tpu.pipeline_mode<synchronous>, transform_indices = @transform_3, window_bounds = array<i64: 16, 8>}, {pipeline_mode = #tpu.pipeline_mode<synchronous>, transform_indices = @transform_4, window_bounds = array<i64: 8, 1>}, {pipeline_mode = #tpu.pipeline_mode<synchronous>, transform_indices = @transform_5, window_bounds = array<i64: 8, 1>}, {pipeline_mode = #tpu.pipeline_mode<synchronous>, transform_indices = @transform_6, window_bounds = array<i64: 2, 8, 256>}]} {
    %c0 = arith.constant 0 : index
    %c0_0 = arith.constant 0 : index
    %0 = vector.load %arg1[%c0, %c0_0] : memref<8x256xf32, #tpu.memory_space<vmem>>, vector<8x256xf32>
    %cst = arith.constant 0.000000e+00 : f32
    %1 = vector.broadcast %cst : f32 to vector<8x256xf32>
    %2 = arith.maximumf %0, %1 : vector<8x256xf32>
    %c17_i32 = arith.constant 17 : i32
    %3 = tpu.dynamic_rotate %2 by %c17_i32 dim 1 : vector<8x256xf32>, i32 -> vector<8x256xf32>
    %c0_1 = arith.constant 0 : index
    %c0_2 = arith.constant 0 : index
    %4 = vector.load %arg2[%c0_1, %c0_2] : memref<8x9xf32, #tpu.memory_space<vmem>>, vector<8x1xf32>
    %c0_3 = arith.constant 0 : index
    %c0_4 = arith.constant 0 : index
    %5 = vector.load %arg3[%c0_3, %c0_4] : memref<9x256xf32, #tpu.memory_space<vmem>>, vector<1x256xf32>
    %6 = vector.broadcast %4 : vector<8x1xf32> to vector<8x256xf32>
    %7 = vector.broadcast %5 : vector<1x256xf32> to vector<8x256xf32>
    %8 = arith.mulf %6, %7 : vector<8x256xf32>
    %9 = arith.mulf %3, %8 : vector<8x256xf32>
    %c16_i32 = arith.constant 16 : i32
    %10 = tpu.dynamic_rotate %2 by %c16_i32 dim 1 : vector<8x256xf32>, i32 -> vector<8x256xf32>
    %c0_5 = arith.constant 0 : index
    %c1 = arith.constant 1 : index
    %11 = vector.load %arg2[%c0_5, %c1] : memref<8x9xf32, #tpu.memory_space<vmem>>, vector<8x1xf32>
    %c1_6 = arith.constant 1 : index
    %c0_7 = arith.constant 0 : index
    %12 = vector.load %arg3[%c1_6, %c0_7] : memref<9x256xf32, #tpu.memory_space<vmem>>, vector<1x256xf32>
    %13 = vector.broadcast %11 : vector<8x1xf32> to vector<8x256xf32>
    %14 = vector.broadcast %12 : vector<1x256xf32> to vector<8x256xf32>
    %15 = arith.mulf %13, %14 : vector<8x256xf32>
    %16 = arith.mulf %10, %15 : vector<8x256xf32>
    %17 = arith.addf %9, %16 : vector<8x256xf32>
    %c15_i32 = arith.constant 15 : i32
    %18 = tpu.dynamic_rotate %2 by %c15_i32 dim 1 : vector<8x256xf32>, i32 -> vector<8x256xf32>
    %c0_8 = arith.constant 0 : index
    %c2 = arith.constant 2 : index
    %19 = vector.load %arg2[%c0_8, %c2] : memref<8x9xf32, #tpu.memory_space<vmem>>, vector<8x1xf32>
    %c2_9 = arith.constant 2 : index
    %c0_10 = arith.constant 0 : index
    %20 = vector.load %arg3[%c2_9, %c0_10] : memref<9x256xf32, #tpu.memory_space<vmem>>, vector<1x256xf32>
    %21 = vector.broadcast %19 : vector<8x1xf32> to vector<8x256xf32>
    %22 = vector.broadcast %20 : vector<1x256xf32> to vector<8x256xf32>
    %23 = arith.mulf %21, %22 : vector<8x256xf32>
    %24 = arith.mulf %18, %23 : vector<8x256xf32>
    %25 = arith.addf %17, %24 : vector<8x256xf32>
    %c1_i32 = arith.constant 1 : i32
    %26 = tpu.dynamic_rotate %2 by %c1_i32 dim 1 : vector<8x256xf32>, i32 -> vector<8x256xf32>
    %c0_11 = arith.constant 0 : index
    %c3 = arith.constant 3 : index
    %27 = vector.load %arg2[%c0_11, %c3] : memref<8x9xf32, #tpu.memory_space<vmem>>, vector<8x1xf32>
    %c3_12 = arith.constant 3 : index
    %c0_13 = arith.constant 0 : index
    %28 = vector.load %arg3[%c3_12, %c0_13] : memref<9x256xf32, #tpu.memory_space<vmem>>, vector<1x256xf32>
    %29 = vector.broadcast %27 : vector<8x1xf32> to vector<8x256xf32>
    %30 = vector.broadcast %28 : vector<1x256xf32> to vector<8x256xf32>
    %31 = arith.mulf %29, %30 : vector<8x256xf32>
    %32 = arith.mulf %26, %31 : vector<8x256xf32>
    %33 = arith.addf %25, %32 : vector<8x256xf32>
    %c0_14 = arith.constant 0 : index
    %c4 = arith.constant 4 : index
    %34 = vector.load %arg2[%c0_14, %c4] : memref<8x9xf32, #tpu.memory_space<vmem>>, vector<8x1xf32>
    %35 = vector.broadcast %34 : vector<8x1xf32> to vector<8x256xf32>
    %36 = arith.mulf %2, %35 : vector<8x256xf32>
    %37 = arith.addf %33, %36 : vector<8x256xf32>
    %c255_i32 = arith.constant 255 : i32
    %38 = tpu.dynamic_rotate %2 by %c255_i32 dim 1 : vector<8x256xf32>, i32 -> vector<8x256xf32>
    %c0_15 = arith.constant 0 : index
    %c5 = arith.constant 5 : index
    %39 = vector.load %arg2[%c0_15, %c5] : memref<8x9xf32, #tpu.memory_space<vmem>>, vector<8x1xf32>
    %c5_16 = arith.constant 5 : index
    %c0_17 = arith.constant 0 : index
    %40 = vector.load %arg3[%c5_16, %c0_17] : memref<9x256xf32, #tpu.memory_space<vmem>>, vector<1x256xf32>
    %41 = vector.broadcast %39 : vector<8x1xf32> to vector<8x256xf32>
    %42 = vector.broadcast %40 : vector<1x256xf32> to vector<8x256xf32>
    %43 = arith.mulf %41, %42 : vector<8x256xf32>
    %44 = arith.mulf %38, %43 : vector<8x256xf32>
    %45 = arith.addf %37, %44 : vector<8x256xf32>
    %c241_i32 = arith.constant 241 : i32
    %46 = tpu.dynamic_rotate %2 by %c241_i32 dim 1 : vector<8x256xf32>, i32 -> vector<8x256xf32>
    %c0_18 = arith.constant 0 : index
    %c6 = arith.constant 6 : index
    %47 = vector.load %arg2[%c0_18, %c6] : memref<8x9xf32, #tpu.memory_space<vmem>>, vector<8x1xf32>
    %c6_19 = arith.constant 6 : index
    %c0_20 = arith.constant 0 : index
    %48 = vector.load %arg3[%c6_19, %c0_20] : memref<9x256xf32, #tpu.memory_space<vmem>>, vector<1x256xf32>
    %49 = vector.broadcast %47 : vector<8x1xf32> to vector<8x256xf32>
    %50 = vector.broadcast %48 : vector<1x256xf32> to vector<8x256xf32>
    %51 = arith.mulf %49, %50 : vector<8x256xf32>
    %52 = arith.mulf %46, %51 : vector<8x256xf32>
    %53 = arith.addf %45, %52 : vector<8x256xf32>
    %c240_i32 = arith.constant 240 : i32
    %54 = tpu.dynamic_rotate %2 by %c240_i32 dim 1 : vector<8x256xf32>, i32 -> vector<8x256xf32>
    %c0_21 = arith.constant 0 : index
    %c7 = arith.constant 7 : index
    %55 = vector.load %arg2[%c0_21, %c7] : memref<8x9xf32, #tpu.memory_space<vmem>>, vector<8x1xf32>
    %c7_22 = arith.constant 7 : index
    %c0_23 = arith.constant 0 : index
    %56 = vector.load %arg3[%c7_22, %c0_23] : memref<9x256xf32, #tpu.memory_space<vmem>>, vector<1x256xf32>
    %57 = vector.broadcast %55 : vector<8x1xf32> to vector<8x256xf32>
    %58 = vector.broadcast %56 : vector<1x256xf32> to vector<8x256xf32>
    %59 = arith.mulf %57, %58 : vector<8x256xf32>
    %60 = arith.mulf %54, %59 : vector<8x256xf32>
    %61 = arith.addf %53, %60 : vector<8x256xf32>
    %c239_i32 = arith.constant 239 : i32
    %62 = tpu.dynamic_rotate %2 by %c239_i32 dim 1 : vector<8x256xf32>, i32 -> vector<8x256xf32>
    %c0_24 = arith.constant 0 : index
    %c8 = arith.constant 8 : index
    %63 = vector.load %arg2[%c0_24, %c8] : memref<8x9xf32, #tpu.memory_space<vmem>>, vector<8x1xf32>
    %c8_25 = arith.constant 8 : index
    %c0_26 = arith.constant 0 : index
    %64 = vector.load %arg3[%c8_25, %c0_26] : memref<9x256xf32, #tpu.memory_space<vmem>>, vector<1x256xf32>
    %65 = vector.broadcast %63 : vector<8x1xf32> to vector<8x256xf32>
    %66 = vector.broadcast %64 : vector<1x256xf32> to vector<8x256xf32>
    %67 = arith.mulf %65, %66 : vector<8x256xf32>
    %68 = arith.mulf %62, %67 : vector<8x256xf32>
    %69 = arith.addf %61, %68 : vector<8x256xf32>
    %c0_27 = arith.constant 0 : index
    %c0_28 = arith.constant 0 : index
    %70 = vector.load %arg4[%c0_27, %c0_28] : memref<16x8xf32, #tpu.memory_space<vmem>>, vector<16x8xf32>
    %cst_29 = arith.constant dense<0.000000e+00> : vector<16x256xf32>
    %71 = tpu.matmul %70, %69, %cst_29 {dimension_numbers = #tpu.dot_dimension_numbers<[1], [0], [0], [1], [0, 0, 1, 1], [], []>} : vector<16x8xf32>, vector<8x256xf32>, vector<16x256xf32> -> vector<16x256xf32>
    %72 = vector.shape_cast %71 : vector<16x256xf32> to vector<2x8x256xf32>
    %cst_30 = arith.constant dense<0.000000e+00> : vector<2x8xf32>
    %73 = vector.multi_reduction <add>, %72, %cst_30 [2] : vector<2x8x256xf32> to vector<2x8xf32>
    %74 = vector.shape_cast %73 : vector<2x8xf32> to vector<2x8x1xf32>
    %cst_31 = arith.constant dense<0.000000e+00> : vector<8x1xf32>
    %75 = vector.multi_reduction <add>, %74, %cst_31 [0] : vector<2x8x1xf32> to vector<8x1xf32>
    %76 = vector.shape_cast %75 : vector<8x1xf32> to vector<1x8x1xf32>
    %cst_32 = arith.constant 0.001953125 : f32
    %77 = vector.broadcast %cst_32 : f32 to vector<1x8x1xf32>
    %78 = arith.mulf %76, %77 : vector<1x8x1xf32>
    %79 = vector.broadcast %78 : vector<1x8x1xf32> to vector<2x8x256xf32>
    %80 = arith.subf %72, %79 : vector<2x8x256xf32>
    %81 = arith.mulf %80, %80 : vector<2x8x256xf32>
    %cst_33 = arith.constant dense<0.000000e+00> : vector<2x8xf32>
    %82 = vector.multi_reduction <add>, %81, %cst_33 [2] : vector<2x8x256xf32> to vector<2x8xf32>
    %83 = vector.shape_cast %82 : vector<2x8xf32> to vector<2x8x1xf32>
    %cst_34 = arith.constant dense<0.000000e+00> : vector<8x1xf32>
    %84 = vector.multi_reduction <add>, %83, %cst_34 [0] : vector<2x8x1xf32> to vector<8x1xf32>
    %85 = vector.shape_cast %84 : vector<8x1xf32> to vector<1x8x1xf32>
    %cst_35 = arith.constant 0.001953125 : f32
    %86 = vector.broadcast %cst_35 : f32 to vector<1x8x1xf32>
    %87 = arith.mulf %85, %86 : vector<1x8x1xf32>
    %c0_36 = arith.constant 0 : index
    %c0_37 = arith.constant 0 : index
    %88 = vector.load %arg5[%c0_36, %c0_37] : memref<8x1xf32, #tpu.memory_space<vmem>>, vector<8x1xf32>
    %89 = vector.shape_cast %88 : vector<8x1xf32> to vector<1x8x1xf32>
    %cst_38 = arith.constant 9.99999974E-6 : f32
    %90 = vector.broadcast %cst_38 : f32 to vector<1x8x1xf32>
    %91 = arith.addf %87, %90 : vector<1x8x1xf32>
    %92 = math.rsqrt %91 : vector<1x8x1xf32>
    %93 = arith.mulf %89, %92 : vector<1x8x1xf32>
    %94 = vector.broadcast %93 : vector<1x8x1xf32> to vector<2x8x256xf32>
    %95 = arith.mulf %80, %94 : vector<2x8x256xf32>
    %c0_39 = arith.constant 0 : index
    %c0_40 = arith.constant 0 : index
    %96 = vector.load %arg6[%c0_39, %c0_40] : memref<8x1xf32, #tpu.memory_space<vmem>>, vector<8x1xf32>
    %97 = vector.shape_cast %96 : vector<8x1xf32> to vector<1x8x1xf32>
    %98 = vector.broadcast %97 : vector<1x8x1xf32> to vector<2x8x256xf32>
    %99 = arith.addf %95, %98 : vector<2x8x256xf32>
    %c0_41 = arith.constant 0 : index
    %c0_42 = arith.constant 0 : index
    %c0_43 = arith.constant 0 : index
    %100 = vector.load %arg7[%c0_41, %c0_42, %c0_43] : memref<2x8x256xf32, #tpu.memory_space<vmem>>, vector<2x8x256xf32>
    tpu.vector_store %arg7[%c0_41, %c0_42, %c0_43], %99 {strides = array<i32>} : memref<2x8x256xf32, #tpu.memory_space<vmem>>, vector<2x8x256xf32>,
    return
  }
  func.func @transform_0(%arg0: i32) -> (i32, i32) {
    %c0_i32 = arith.constant 0 : i32
    %c0_i32_0 = arith.constant 0 : i32
    %c0_i32_1 = arith.constant 0 : i32
    return %c0_i32, %c0_i32_0 : i32, i32
  }
  func.func @transform_1(%arg0: i32) -> (i32, i32) {
    %c0_i32 = arith.constant 0 : i32
    %c0_i32_0 = arith.constant 0 : i32
    %c0_i32_1 = arith.constant 0 : i32
    return %c0_i32, %c0_i32_0 : i32, i32
  }
  func.func @transform_2(%arg0: i32) -> (i32, i32) {
    %c0_i32 = arith.constant 0 : i32
    %c0_i32_0 = arith.constant 0 : i32
    %c0_i32_1 = arith.constant 0 : i32
    return %c0_i32, %c0_i32_0 : i32, i32
  }
  func.func @transform_3(%arg0: i32) -> (i32, i32) {
    %c0_i32 = arith.constant 0 : i32
    %c0_i32_0 = arith.constant 0 : i32
    %c0_i32_1 = arith.constant 0 : i32
    return %c0_i32, %c0_i32_0 : i32, i32
  }
  func.func @transform_4(%arg0: i32) -> (i32, i32) {
    %c0_i32 = arith.constant 0 : i32
    %c0_i32_0 = arith.constant 0 : i32
    %c0_i32_1 = arith.constant 0 : i32
    return %c0_i32, %c0_i32_0 : i32, i32
  }
  func.func @transform_5(%arg0: i32) -> (i32, i32) {
    %c0_i32 = arith.constant 0 : i32
    %c0_i32_0 = arith.constant 0 : i32
    %c0_i32_1 = arith.constant 0 : i32
    return %c0_i32, %c0_i32_0 : i32, i32
  }
  func.func @transform_6(%arg0: i32) -> (i32, i32, i32) {
    %c0_i32 = arith.constant 0 : i32
    %c0_i32_0 = arith.constant 0 : i32
    %c0_i32_1 = arith.constant 0 : i32
    %c0_i32_2 = arith.constant 0 : i32
    return %c0_i32, %c0_i32_0, %c0_i32_1 : i32, i32, i32
  }
}

</mosaic_0001>

<llo_original>
// kernel: tpu_custom_call.1
$region0: #{tpu_custom_call.1}
  #allocation0 [shape = 'u32[]', space=smem, size = 0x4, offset = 0x4, fixed_abs, tag = 'smem constant byte address 0x4 - core index']
  #allocation1 [shape = 'u32[144,128]{1,0:T(1,128)}', space=vmem, size = 0x12000, scoped, tag = 'internal scratch']
  %s0 = inlined_call_operand.vmem [shape: f32[8,256], index: 0, kind: input, shape index: {}]
  %s1 = inlined_call_operand.hbm [shape: f32[8,9], index: 1, kind: input, shape index: {}]
  %s2 = inlined_call_operand.vmem [shape: f32[9,256], index: 2, kind: input, shape index: {}]
  %s3 = inlined_call_operand.vmem [shape: f32[16,8], index: 3, kind: input, shape index: {}]
  %s4 = inlined_call_operand.vmem [shape: f32[8,1], index: 4, kind: input, shape index: {}]
  %s5 = inlined_call_operand.vmem [shape: f32[8,1], index: 5, kind: input, shape index: {}]
  %s6 = inlined_call_operand.hbm [shape: f32[2,8,256], index: 6, kind: output, shape index: {}]
  %s7 = sld [smem:[#allocation0]]
  $region38: #{tpu_custom_call.1} parent=0
    _
  %s9 = ssub.s32 1, %s7
  %s10 = scalar_select 0, %s9, %s7
  $region1: #{tpu_custom_call.1} parent=0
    #allocation2 [shape = 'u8[4096]{0}', space=vmem, size = 0x1000, scoped, tag = 'input window, operand 1, single buffered']
    #allocation3 [shape = 's32[1]{0}', space=sflag, size = 0x4, scoped, tag = 'scoped memory for tpu_custom_call.1']
    #allocation4 [shape = 's32[1]{0}', space=sflag, size = 0x4, scoped, tag = 'scoped memory for tpu_custom_call.1']
    #allocation5 [shape = 'u8[16384]{0}', space=vmem, size = 0x4000, scoped, tag = 'output window, operand 0, single buffered']
    %11 = vsyncpa [#allocation3], 0
    %12 = vsyncpa [#allocation4], 0
    // Predicated region
    $region2: #{tpu_custom_call.1} parent=1 // pred_check
      _
    $region3: #{tpu_custom_call.1} parent=1 // pred_check_branch
      %14 = sbr.rel (0) target = $region5
    $region4: #{tpu_custom_call.1} parent=1 // pred_region
      _
    $region5: #{tpu_custom_call.1} parent=1 // pred_fallthru
      _
    // Predicated region
    $region6: #{tpu_custom_call.1} parent=1 // pred_check
      _
    $region7: #{tpu_custom_call.1} parent=1 // pred_check_branch
      %16 = sbr.rel (0) target = $region9
    $region8: #{tpu_custom_call.1} parent=1 // pred_region
      %s18 = ssub.s32 128, 128
      %19 = vsyncadd [#allocation3], %s18
      %s21 = sshll.u32 [#allocation2], 4
      %s22 = int_to_ptr.vmem [resolvable:$true] %s21
      %24 = dma.hbm_to_vmem [thread:$0]  %s1, 128, %s22, [#allocation3]
    $region9: #{tpu_custom_call.1} parent=1 // pred_fallthru
      _
    // Predicated region
    $region10: #{tpu_custom_call.1} parent=1 // pred_check
      _
    $region11: #{tpu_custom_call.1} parent=1 // pred_check_branch
      %26 = sbr.rel (0) target = $region13
    $region12: #{tpu_custom_call.1} parent=1 // pred_region
      _
    $region13: #{tpu_custom_call.1} parent=1 // pred_fallthru
      _
    // Predicated region
    $region14: #{tpu_custom_call.1} parent=1 // pred_check
      _
    $region15: #{tpu_custom_call.1} parent=1 // pred_check_branch
      %28 = sbr.rel (0) target = $region17
    $region16: #{tpu_custom_call.1} parent=1 // pred_region
      _
    $region17: #{tpu_custom_call.1} parent=1 // pred_fallthru
      _
    // Predicated region
    $region18: #{tpu_custom_call.1} parent=1 // pred_check
      _
    $region19: #{tpu_custom_call.1} parent=1 // pred_check_branch
      %30 = sbr.rel (0) target = $region21
    $region20: #{tpu_custom_call.1} parent=1 // pred_region
      _
    $region21: #{tpu_custom_call.1} parent=1 // pred_fallthru
      _
    // Predicated region
    $region22: #{tpu_custom_call.1} parent=1 // pred_check
      _
    $region23: #{tpu_custom_call.1} parent=1 // pred_check_branch
      %32 = sbr.rel (0) target = $region25
    $region24: #{tpu_custom_call.1} parent=1 // pred_region
      _
    $region25: #{tpu_custom_call.1} parent=1 // pred_fallthru
      _
    // Predicated region
    $region26: #{tpu_custom_call.1} parent=1 // pred_check
      _
    $region27: #{tpu_custom_call.1} parent=1 // pred_check_branch
      %34 = sbr.rel (0) target = $region29
    $region28: #{tpu_custom_call.1} parent=1 // pred_region
      %35 = dma.done [#allocation3], 128
    $region29: #{tpu_custom_call.1} parent=1 // pred_fallthru
      _
    %v36 = vld [vmem:[%s0] sm:$0xff]
    %v37 = vld [vmem:[%s0 + $0x8] sm:$0xff]
    %v38 = vmax.f32 %v36, 0.0
    %v39 = vmax.f32 %v37, 0.0
    %40 = vrot.lane.b32.xlu0 %v38, 17
    %v41 = vpop.permute.xlu0 %40
    %42 = vrot.lane.b32.xlu0 %v39, 17
    %v43 = vpop.permute.xlu0 %42
    %v44 = vlaneseq
    %v45 = vand.u32 %v44, 127
    %vm46 = vcmp.lt.s32.totalorder %v45, 17
    %v47 = vsel %vm46, %v41, %v43
    %v48 = vsel %vm46, %v43, %v41
    %v49 = vld [vmem:[#allocation2] sm:$0xff]
    %v50 = vld [vmem:[%s2] ss:$8 sm:$0x3]
    %52 = vset.pattern.permute.xlu0 0
    %53 = vperm.xlu0 %52, %v49
    %v54 = vpop.permute.xlu0 %53
    %v57 = vlaneseq
    %v58 = vshrl.u32 %v57, 7
    %v59 = vsub.s32 0, %v58
    %v60 = vrot.slane %v50, %v59
    %v61 = vlaneseq
    %v62 = vshrl.u32 %v61, 7
    %v63 = vsub.s32 1, %v62
    %v64 = vrot.slane %v50, %v63
    %v67 = vmul.f32 %v54, %v60
    %v68 = vmul.f32 %v54, %v64
    %v69 = vmul.f32 %v48, %v67
    %v70 = vmul.f32 %v47, %v68
    %71 = vrot.lane.b32.xlu0 %v38, 16
    %v72 = vpop.permute.xlu0 %71
    %73 = vrot.lane.b32.xlu0 %v39, 16
    %v74 = vpop.permute.xlu0 %73
    %vm75 = vcmp.lt.s32.totalorder %v45, 16
    %v76 = vsel %vm75, %v72, %v74
    %v77 = vsel %vm75, %v74, %v72
    %s78 = scalar_lea.vmem %s2, 1
    %v79 = vld [vmem:[%s78] ss:$8 sm:$0x3]
    %80 = vset.pattern.permute.xlu0 1
    %81 = vperm.xlu0 %80, %v49
    %v82 = vpop.permute.xlu0 %81
    %v85 = vlaneseq
    %v86 = vshrl.u32 %v85, 7
    %v87 = vsub.s32 0, %v86
    %v88 = vrot.slane %v79, %v87
    %v89 = vlaneseq
    %v90 = vshrl.u32 %v89, 7
    %v91 = vsub.s32 1, %v90
    %v92 = vrot.slane %v79, %v91
    %v95 = vmul.f32 %v82, %v88
    %v96 = vmul.f32 %v82, %v92
    %v97 = vmul.f32 %v77, %v95
    %v98 = vmul.f32 %v76, %v96
    %v99 = vadd.f32 %v69, %v97
    %v100 = vadd.f32 %v70, %v98
    %101 = vrot.lane.b32.xlu0 %v38, 15
    %v102 = vpop.permute.xlu0 %101
    %103 = vrot.lane.b32.xlu0 %v39, 15
    %v104 = vpop.permute.xlu0 %103
    %vm105 = vcmp.lt.s32.totalorder %v45, 15
    %v106 = vsel %vm105, %v102, %v104
    %v107 = vsel %vm105, %v104, %v102
    %s108 = scalar_lea.vmem %s2, 2
    %v109 = vld [vmem:[%s108] ss:$8 sm:$0x3]
    %110 = vset.pattern.permute.xlu0 2
    %111 = vperm.xlu0 %110, %v49
    %v112 = vpop.permute.xlu0 %111
    %v115 = vlaneseq
    %v116 = vshrl.u32 %v115, 7
    %v117 = vsub.s32 0, %v116
    %v118 = vrot.slane %v109, %v117
    %v119 = vlaneseq
    %v120 = vshrl.u32 %v119, 7
    %v121 = vsub.s32 1, %v120
    %v122 = vrot.slane %v109, %v121
    %v125 = vmul.f32 %v112, %v118
    %v126 = vmul.f32 %v112, %v122
    %v127 = vmul.f32 %v107, %v125
    %v128 = vmul.f32 %v106, %v126
    %v129 = vadd.f32 %v99, %v127
    %v130 = vadd.f32 %v100, %v128
    %131 = vrot.lane.b32.xlu0 %v38, 1
    %v132 = vpop.permute.xlu0 %131
    %133 = vrot.lane.b32.xlu0 %v39, 1
    %v134 = vpop.permute.xlu0 %133
    %vm135 = vcmp.lt.s32.totalorder %v45, 1
    %v136 = vsel %vm135, %v132, %v134
    %v137 = vsel %vm135, %v134, %v132
    %s138 = scalar_lea.vmem %s2, 3
    %v139 = vld [vmem:[%s138] ss:$8 sm:$0x3]
    %140 = vset.pattern.permute.xlu0 3
    %141 = vperm.xlu0 %140, %v49
    %v142 = vpop.permute.xlu0 %141
    %v145 = vlaneseq
    %v146 = vshrl.u32 %v145, 7
    %v147 = vsub.s32 0, %v146
    %v148 = vrot.slane %v139, %v147
    %v149 = vlaneseq
    %v150 = vshrl.u32 %v149, 7
    %v151 = vsub.s32 1, %v150
    %v152 = vrot.slane %v139, %v151
    %v155 = vmul.f32 %v142, %v148
    %v156 = vmul.f32 %v142, %v152
    %v157 = vmul.f32 %v137, %v155
    %v158 = vmul.f32 %v136, %v156
    %v159 = vadd.f32 %v129, %v157
    %v160 = vadd.f32 %v130, %v158
    %161 = vset.pattern.permute.xlu0 4
    %162 = vperm.xlu0 %161, %v49
    %v163 = vpop.permute.xlu0 %162
    %v165 = vmul.f32 %v38, %v163
    %v166 = vmul.f32 %v39, %v163
    %v167 = vadd.f32 %v159, %v165
    %v168 = vadd.f32 %v160, %v166
    %169 = vrot.lane.b32.xlu0 %v38, 127
    %v170 = vpop.permute.xlu0 %169
    %171 = vrot.lane.b32.xlu0 %v39, 127
    %v172 = vpop.permute.xlu0 %171
    %vm173 = vcmp.lt.s32.totalorder %v45, 127
    %v174 = vsel %vm173, %v170, %v172
    %v175 = vsel %vm173, %v172, %v170
    %s176 = scalar_lea.vmem %s2, 5
    %v177 = vld [vmem:[%s176] ss:$8 sm:$0x3]
    %178 = vset.pattern.permute.xlu0 5
    %179 = vperm.xlu0 %178, %v49
    %v180 = vpop.permute.xlu0 %179
    %v183 = vlaneseq
    %v184 = vshrl.u32 %v183, 7
    %v185 = vsub.s32 0, %v184
    %v186 = vrot.slane %v177, %v185
    %v187 = vlaneseq
    %v188 = vshrl.u32 %v187, 7
    %v189 = vsub.s32 1, %v188
    %v190 = vrot.slane %v177, %v189
    %v193 = vmul.f32 %v180, %v186
    %v194 = vmul.f32 %v180, %v190
    %v195 = vmul.f32 %v174, %v193
    %v196 = vmul.f32 %v175, %v194
    %v197 = vadd.f32 %v167, %v195
    %v198 = vadd.f32 %v168, %v196
    %199 = vrot.lane.b32.xlu0 %v38, 113
    %v200 = vpop.permute.xlu0 %199
    %201 = vrot.lane.b32.xlu0 %v39, 113
    %v202 = vpop.permute.xlu0 %201
    %vm203 = vcmp.lt.s32.totalorder %v45, 113
    %v204 = vsel %vm203, %v200, %v202
    %v205 = vsel %vm203, %v202, %v200
    %s206 = scalar_lea.vmem %s2, 6
    %v207 = vld [vmem:[%s206] ss:$8 sm:$0x3]
    %208 = vset.pattern.permute.xlu0 6
    %209 = vperm.xlu0 %208, %v49
    %v210 = vpop.permute.xlu0 %209
    %v213 = vlaneseq
    %v214 = vshrl.u32 %v213, 7
    %v215 = vsub.s32 0, %v214
    %v216 = vrot.slane %v207, %v215
    %v217 = vlaneseq
    %v218 = vshrl.u32 %v217, 7
    %v219 = vsub.s32 1, %v218
    %v220 = vrot.slane %v207, %v219
    %v223 = vmul.f32 %v210, %v216
    %v224 = vmul.f32 %v210, %v220
    %v225 = vmul.f32 %v204, %v223
    %v226 = vmul.f32 %v205, %v224
    %v227 = vadd.f32 %v197, %v225
    %v228 = vadd.f32 %v198, %v226
    %229 = vrot.lane.b32.xlu0 %v38, 112
    %v230 = vpop.permute.xlu0 %229
    %231 = vrot.lane.b32.xlu0 %v39, 112
    %v232 = vpop.permute.xlu0 %231
    %vm233 = vcmp.lt.s32.totalorder %v45, 112
    %v234 = vsel %vm233, %v230, %v232
    %v235 = vsel %vm233, %v232, %v230
    %s236 = scalar_lea.vmem %s2, 7
    %v237 = vld [vmem:[%s236] ss:$8 sm:$0x3]
    %238 = vset.pattern.permute.xlu0 7
    %239 = vperm.xlu0 %238, %v49
    %v240 = vpop.permute.xlu0 %239
    %v243 = vlaneseq
    %v244 = vshrl.u32 %v243, 7
    %v245 = vsub.s32 0, %v244
    %v246 = vrot.slane %v237, %v245
    %v247 = vlaneseq
    %v248 = vshrl.u32 %v247, 7
    %v249 = vsub.s32 1, %v248
    %v250 = vrot.slane %v237, %v249
    %v253 = vmul.f32 %v240, %v246
    %v254 = vmul.f32 %v240, %v250
    %v255 = vmul.f32 %v234, %v253
    %v256 = vmul.f32 %v235, %v254
    %v257 = vadd.f32 %v227, %v255
    %v258 = vadd.f32 %v228, %v256
    %259 = vrot.lane.b32.xlu0 %v38, 111
    %v260 = vpop.permute.xlu0 %259
    %261 = vrot.lane.b32.xlu0 %v39, 111
    %v262 = vpop.permute.xlu0 %261
    %vm263 = vcmp.lt.s32.totalorder %v45, 111
    %v264 = vsel %vm263, %v260, %v262
    %v265 = vsel %vm263, %v262, %v260
    %s266 = scalar_lea.vmem %s2, 16
    %v267 = vld [vmem:[%s266] ss:$8 sm:$0x3]
    %268 = vset.pattern.permute.xlu0 8
    %269 = vperm.xlu0 %268, %v49
    %v270 = vpop.permute.xlu0 %269
    %v273 = vlaneseq
    %v274 = vshrl.u32 %v273, 7
    %v275 = vsub.s32 0, %v274
    %v276 = vrot.slane %v267, %v275
    %v277 = vlaneseq
    %v278 = vshrl.u32 %v277, 7
    %v279 = vsub.s32 1, %v278
    %v280 = vrot.slane %v267, %v279
    %v283 = vmul.f32 %v270, %v276
    %v284 = vmul.f32 %v270, %v280
    %v285 = vmul.f32 %v264, %v283
    %v286 = vmul.f32 %v265, %v284
    %v287 = vadd.f32 %v257, %v285
    %v288 = vadd.f32 %v258, %v286
    %v289 = vld [vmem:[%s3] sm:$0xff]
    %v290 = vld [vmem:[%s3 + $0x8] sm:$0xff]
    %vm291 = vcmask 64512
    %v293 = vsel %vm291, %v289, 0
    %v296 = vsel %vm291, %v290, 0
    %298 = vmatprep.subr.mxu0 %v288
    %299 = vmatpush1.msra.mxu0 %v287
    %300 = vmatprep.subr.mxu0 0.0
    %301 = vmatpush1.msra.mxu0 0.0
    %302 = vmatprep.subr.mxu0 0.0
    %303 = vmatpush1.msra.mxu0 0.0
    %304 = vmatprep.subr.mxu0 0.0
    %305 = vmatpush1.msra.mxu0 0.0
    %306 = vmatprep.subr.mxu0 0.0
    %307 = vmatpush1.msra.mxu0 0.0
    %308 = vmatprep.subr.mxu0 0.0
    %309 = vmatpush1.msra.mxu0 0.0
    %310 = vmatprep.subr.mxu0 0.0
    %311 = vmatpush1.msra.mxu0 0.0
    %312 = vmatprep.subr.mxu0 0.0
    %313 = vmatpush1.msra.mxu0 0.0
    %314 = vmatprep.subr.mxu0 0.0
    %315 = vmatpush1.msra.mxu0 0.0
    %316 = vmatprep.subr.mxu0 0.0
    %317 = vmatpush1.msra.mxu0 0.0
    %318 = vmatprep.subr.mxu0 0.0
    %319 = vmatpush1.msra.mxu0 0.0
    %320 = vmatprep.subr.mxu0 0.0
    %321 = vmatpush1.msra.mxu0 0.0
    %322 = vmatprep.subr.mxu0 0.0
    %323 = vmatpush1.msra.mxu0 0.0
    %324 = vmatprep.subr.mxu0 0.0
    %325 = vmatpush1.msra.mxu0 0.0
    %326 = vmatprep.subr.mxu0 0.0
    %327 = vmatpush1.msra.mxu0 0.0
    %328 = vmatprep.subr.mxu0 0.0
    %329 = vmatpush1.msra.mxu0 0.0
    %330 = vmatprep.subr.mxu0 0.0
    %331 = vmatpush1.msra.mxu0 0.0
    %332 = vmatprep.subr.mxu0 0.0
    %333 = vmatpush1.msra.mxu0 0.0
    %334 = vmatprep.subr.mxu0 0.0
    %335 = vmatpush1.msra.mxu0 0.0
    %336 = vmatprep.subr.mxu0 0.0
    %337 = vmatpush1.msra.mxu0 0.0
    %338 = vmatprep.subr.mxu0 0.0
    %339 = vmatpush1.msra.mxu0 0.0
    %340 = vmatprep.subr.mxu0 0.0
    %341 = vmatpush1.msra.mxu0 0.0
    %342 = vmatprep.subr.mxu0 0.0
    %343 = vmatpush1.msra.mxu0 0.0
    %344 = vmatprep.subr.mxu0 0.0
    %345 = vmatpush1.msra.mxu0 0.0
    %346 = vmatprep.subr.mxu0 0.0
    %347 = vmatpush1.msra.mxu0 0.0
    %348 = vmatprep.subr.mxu0 0.0
    %349 = vmatpush1.msra.mxu0 0.0
    %350 = vmatprep.subr.mxu0 0.0
    %351 = vmatpush1.msra.mxu0 0.0
    %352 = vmatprep.subr.mxu0 0.0
    %353 = vmatpush1.msra.mxu0 0.0
    %354 = vmatprep.subr.mxu0 0.0
    %355 = vmatpush1.msra.mxu0 0.0
    %356 = vmatprep.subr.mxu0 0.0
    %357 = vmatpush1.msra.mxu0 0.0
    %358 = vmatprep.subr.mxu0 0.0
    %359 = vmatpush1.msra.mxu0 0.0
    %360 = vmatprep.subr.mxu0 0.0
    %361 = vmatpush1.msra.mxu0 0.0
    %362 = vmatprep.mubr.f32.mxu0 0.0
    %363 = vmatmul.mubr.f32.gmra.mrb[0].mxu0 %v293
    %v364 = vpop.f32.mrb[0].mxu0
    %v365 = vadd.f32 0.0, %v364
    %v366 = vpop.f32.mrb[0].mxu0
    %v367 = vadd.f32 0.0, %v366
    %368 = vmatprep.mubr.f32.mxu0 0.0
    %369 = vmatmul.mubr.f32.gmra.mrb[0].mxu0 %v296
    %v370 = vpop.f32.mrb[0].mxu0
    %v371 = vadd.f32 0.0, %v370
    %v372 = vpop.f32.mrb[0].mxu0
    %v373 = vadd.f32 0.0, %v372
    %374 = vdwg.mxu0
    %v375 = vadd.f32 %v365, %v367
    %376 = vadd.xlane.f32.xlu0 %v375
    %v377 = vpop.xlane.xlu0 %376
    %v378 = vadd.f32 %v371, %v373
    %379 = vadd.xlane.f32.xlu0 %v378
    %v380 = vpop.xlane.xlu0 %379
    %v381 = vadd.f32 %v377, %v380
    %v382 = vmul.f32 %v381, 0.001953125
    %v383 = vsub.f32 %v365, %v382
    %v384 = vsub.f32 %v367, %v382
    %v385 = vsub.f32 %v371, %v382
    %v386 = vsub.f32 %v373, %v382
    %v387 = vmul.f32 %v383, %v383
    %v388 = vmul.f32 %v384, %v384
    %v389 = vmul.f32 %v385, %v385
    %v390 = vmul.f32 %v386, %v386
    %v391 = vadd.f32 %v387, %v388
    %392 = vadd.xlane.f32.xlu0 %v391
    %v393 = vpop.xlane.xlu0 %392
    %v394 = vadd.f32 %v389, %v390
    %395 = vadd.xlane.f32.xlu0 %v394
    %v396 = vpop.xlane.xlu0 %395
    %v397 = vadd.f32 %v393, %v396
    %v398 = vmul.f32 %v397, 0.001953125
    %v399 = vld [vmem:[%s4] sm:$0xff]
    %v400 = vadd.f32 %v398, 1e-05
    %v401 = vrsqrt.pop %v400
    %v402 = vmul.f32 %v399, %v401
    %404 = vset.pattern.permute.xlu0 0
    %405 = vperm.xlu0 %404, %v402
    %v406 = vpop.permute.xlu0 %405
    %v408 = vmul.f32 %v383, %v406
    %v409 = vmul.f32 %v384, %v406
    %v410 = vmul.f32 %v385, %v406
    %v411 = vmul.f32 %v386, %v406
    %v412 = vld [vmem:[%s5] sm:$0xff]
    %414 = vset.pattern.permute.xlu0 0
    %415 = vperm.xlu0 %414, %v412
    %v416 = vpop.permute.xlu0 %415
    %v418 = vadd.f32 %v408, %v416
    %v419 = vadd.f32 %v409, %v416
    %v420 = vadd.f32 %v410, %v416
    %v421 = vadd.f32 %v411, %v416
    %422 = vst [vmem:[#allocation5] sm:$0xff] %v418
    %423 = vst [vmem:[#allocation5 + $0x8] sm:$0xff] %v419
    %424 = vst [vmem:[#allocation5 + $0x10] sm:$0xff] %v420
    %425 = vst [vmem:[#allocation5 + $0x18] sm:$0xff] %v421
    // Predicated region
    $region30: #{tpu_custom_call.1} parent=1 // pred_check
      _
    $region31: #{tpu_custom_call.1} parent=1 // pred_check_branch
      %427 = sbr.rel (0) target = $region33
    $region32: #{tpu_custom_call.1} parent=1 // pred_region
      %s429 = ssub.s32 512, 512
      %430 = vsyncadd [#allocation4], %s429
      %s431 = sshll.u32 [#allocation5], 4
      %s432 = int_to_ptr.vmem [resolvable:$true] %s431
      %437 = dma.vmem_to_hbm [thread:$0]  %s432, 512, %s6, [#allocation4], 256, 256, 16
    $region33: #{tpu_custom_call.1} parent=1 // pred_fallthru
      _
    // Predicated region
    $region34: #{tpu_custom_call.1} parent=1 // pred_check
      _
    $region35: #{tpu_custom_call.1} parent=1 // pred_check_branch
      %439 = sbr.rel (0) target = $region37
    $region36: #{tpu_custom_call.1} parent=1 // pred_region
      %440 = dma.done [#allocation4], 512
    $region37: #{tpu_custom_call.1} parent=1 // pred_fallthru
      _
    %441 = vsyncpa [#allocation3], 1
    %442 = vsyncpa [#allocation4], 1

</llo_original>
